<compile_context>
chip_gen: v6e
topology: v6e:2x2x1
jax: 0.10.0
libtpu: 0.0.40
codegen_flags: <defaults>
</compile_context>

<pallas_src>
import functools

import jax
import jax.numpy as jnp
from jax.experimental import pallas as pl
from jax.experimental.pallas import tpu as pltpu


_VMEM_LIMIT = 32 * 1024 * 1024   # fits scoped/physical VMEM on v5e / v6e / v7x


def _round_up(x, m):
    return ((x + m - 1) // m) * m


# ----------------------------------------------------------------------------
# Kernel 1: down conv — fused LeakyReLU(0.2) + W @ patches, lane-dense output
# ----------------------------------------------------------------------------
def _down_conv_kernel(w_ref, p_ref, o_ref, acc_ref, *, nk, slope):
    k = pl.program_id(1)

    @pl.when(k == 0)
    def _():
        acc_ref[...] = jnp.zeros_like(acc_ref)

    a = p_ref[...]
    a = jnp.where(a >= 0, a, slope * a)        # LeakyReLU; act(0)=0 so zero padding is safe
    acc_ref[...] += jnp.dot(w_ref[...], a, preferred_element_type=jnp.float32)

    @pl.when(k == nk - 1)
    def _():
        o_ref[...] = acc_ref[...]


def down_conv_matmul(w2d, patches, *, slope=0.2, tm_target=512, tk_target=512):
    """w2d: (Cout, K); patches: (K, M) with pixels on lanes.  Returns (Cout, M) f32."""
    Cout, K = w2d.shape
    K2, M = patches.shape
    assert K == K2

    tk = tk_target if K >= tk_target else _round_up(K, 8)
    Kp = _round_up(K, tk)
    tm = tm_target if M >= tm_target else _round_up(M, 128)
    Mp = _round_up(M, tm)

    wp = jnp.pad(w2d, ((0, 0), (0, Kp - K)))
    pp = jnp.pad(patches, ((0, Kp - K), (0, Mp - M)))
    nm, nk = Mp // tm, Kp // tk

    out = pl.pallas_call(
        functools.partial(_down_conv_kernel, nk=nk, slope=slope),
        out_shape=jax.ShapeDtypeStruct((Cout, Mp), jnp.float32),
        grid=(nm, nk),
        in_specs=[pl.BlockSpec((Cout, tk), lambda m, k: (0, k)),   # weight: small, cycles over K only
                  pl.BlockSpec((tk, tm), lambda m, k: (k, m))],
        out_specs=pl.BlockSpec((Cout, tm), lambda m, k: (0, m)),
        scratch_shapes=[pltpu.VMEM((Cout, tm), jnp.float32)],
        compiler_params=pltpu.CompilerParams(
            dimension_semantics=("parallel", "arbitrary"),
            vmem_limit_bytes=_VMEM_LIMIT),
    )(wp, pp)
    return out[:, :M]


# ----------------------------------------------------------------------------
# Kernel 2: up conv (polyphase ConvTranspose) — fused ReLU + BatchNorm statistics
# ----------------------------------------------------------------------------
def _up_conv_bn_stats_kernel(w_ref, p_ref, o_ref, sum_ref, ssq_ref, acc_ref, *, nk):
    ph = pl.program_id(0)
    m = pl.program_id(1)
    k = pl.program_id(2)

    @pl.when((ph == 0) & (m == 0) & (k == 0))
    def _():
        sum_ref[...] = jnp.zeros_like(sum_ref)
        ssq_ref[...] = jnp.zeros_like(ssq_ref)

    @pl.when(k == 0)
    def _():
        acc_ref[...] = jnp.zeros_like(acc_ref)

    a = jnp.maximum(p_ref[0], 0.0)             # ReLU; relu(0)=0 keeps halo / pad exact
    acc_ref[...] += jnp.dot(w_ref[0], a, preferred_element_type=jnp.float32)

    @pl.when(k == nk - 1)
    def _():
        acc = acc_ref[...]
        o_ref[0] = acc
        # per-channel sum / sum-of-squares for train-mode BatchNorm (pixels on lanes)
        sum_ref[...] += jnp.sum(acc, axis=1, keepdims=True)
        ssq_ref[...] += jnp.sum(acc * acc, axis=1, keepdims=True)


def up_conv_with_bn_stats(w_ph, patch_ph, *, tm_target=512, tk_target=512):
    """w_ph: (4, Cout, K); patch_ph: (4, K, M).  Returns (u (4,Cout,Mp), sum, sumsq, M)."""
    P, Cout, K = w_ph.shape
    P2, K2, M = patch_ph.shape
    assert P == 4 and P2 == 4 and K == K2

    tk = tk_target if K >= tk_target else _round_up(K, 8)
    Kp = _round_up(K, tk)
    tm = tm_target if M >= tm_target else _round_up(M, 128)
    Mp = _round_up(M, tm)

    wp = jnp.pad(w_ph, ((0, 0), (0, 0), (0, Kp - K)))
    pp = jnp.pad(patch_ph, ((0, 0), (0, Kp - K), (0, Mp - M)))
    nm, nk = Mp // tm, Kp // tk

    u, s, ssq = pl.pallas_call(
        functools.partial(_up_conv_bn_stats_kernel, nk=nk),
        out_shape=(jax.ShapeDtypeStruct((4, Cout, Mp), jnp.float32),
                   jax.ShapeDtypeStruct((Cout, 1), jnp.float32),
                   jax.ShapeDtypeStruct((Cout, 1), jnp.float32)),
        grid=(4, nm, nk),
        in_specs=[pl.BlockSpec((1, Cout, tk), lambda p, m, k: (p, 0, k)),
                  pl.BlockSpec((1, tk, tm), lambda p, m, k: (p, k, m))],
        out_specs=(pl.BlockSpec((1, Cout, tm), lambda p, m, k: (p, 0, m)),
                   pl.BlockSpec((Cout, 1), lambda p, m, k: (0, 0)),
                   pl.BlockSpec((Cout, 1), lambda p, m, k: (0, 0))),
        scratch_shapes=[pltpu.VMEM((Cout, tm), jnp.float32)],
        compiler_params=pltpu.CompilerParams(
            # BN statistics accumulate across phase & pixel axes -> keep them sequential
            dimension_semantics=("arbitrary", "arbitrary", "arbitrary"),
            vmem_limit_bytes=_VMEM_LIMIT),
    )(wp, pp)
    return u, s, ssq, M


# ----------------------------------------------------------------------------
# Kernel 3: BatchNorm apply (per-channel scale/offset), tiled & lane-dense
# ----------------------------------------------------------------------------
def _bn_apply_kernel(u_ref, s_ref, b_ref, o_ref):
    o_ref[0] = u_ref[0] * s_ref[...] + b_ref[...]


def bn_apply(u, scale, offset):
    P, C, Mp = u.shape
    tm = 512 if (Mp >= 512 and Mp % 512 == 0) else Mp
    nm = Mp // tm
    return pl.pallas_call(
        _bn_apply_kernel,
        out_shape=jax.ShapeDtypeStruct((P, C, Mp), jnp.float32),
        grid=(P, nm),
        in_specs=[pl.BlockSpec((1, C, tm), lambda p, m: (p, 0, m)),
                  pl.BlockSpec((C, 1), lambda p, m: (0, 0)),
                  pl.BlockSpec((C, 1), lambda p, m: (0, 0))],
        out_specs=pl.BlockSpec((1, C, tm), lambda p, m: (p, 0, m)),
        compiler_params=pltpu.CompilerParams(
            dimension_semantics=("parallel", "parallel"),
            vmem_limit_bytes=_VMEM_LIMIT),
    )(u, scale, offset)


# ----------------------------------------------------------------------------
# Plain-JAX glue: layout / patch extraction only (no hot-path compute)
# TODO(synk): move patch extraction into the kernels (halo tiles + shifted matmuls)
#             to drop the im2col HBM blowup entirely.
# ----------------------------------------------------------------------------
def im2col_cm(x, k, stride, pad):
    """x: (N,C,H,W) -> (C*k*k, N*Hout*Wout); rows (c,kh,kw), cols (n,oh,ow) => pixels on lanes."""
    N, C, H, W = x.shape
    xp = jnp.pad(x, ((0, 0), (0, 0), (pad, pad), (pad, pad)))
    Hout = (H + 2 * pad - k) // stride + 1
    Wout = (W + 2 * pad - k) // stride + 1
    cols = []
    for kh in range(k):
        for kw in range(k):
            cols.append(xp[:, :, kh:kh + stride * Hout:stride,
                               kw:kw + stride * Wout:stride])
    p = jnp.stack(cols, axis=2)                               # (N, C, k*k, Hout, Wout)
    return p.transpose(1, 2, 0, 3, 4).reshape(C * k * k, N * Hout * Wout), Hout, Wout


def polyphase_up_patches(d_cm, N, Hd, Wd):
    """Polyphase 2x2 patch matrices for ConvTranspose2d(k=4,s=2,p=1): (4, Ci*4, N*Hd*Wd)."""
    Ci = d_cm.shape[0]
    d = d_cm.reshape(Ci, N, Hd, Wd)
    dp = jnp.pad(d, ((0, 0), (0, 0), (1, 1), (1, 1)))
    phases = []
    for r in range(2):
        for s in range(2):
            slabs = []
            for dr in range(2):
                for dc in range(2):
                    slabs.append(dp[:, :, r + dr:r + dr + Hd, s + dc:s + dc + Wd])
            ph = jnp.stack(slabs, axis=1)                     # (Ci, 4, N, Hd, Wd)
            phases.append(ph.reshape(Ci * 4, N * Hd * Wd))
    return jnp.stack(phases, axis=0)                          # (4, Ci*4, M)


def polyphase_up_weights(w_up):
    """w_up: (Ci, Co, 4, 4) ConvTranspose weight -> (4, Co, Ci*4) phase conv weights.
    Phase (r,s), tap (dr,dc) maps to transposed-conv tap (3-r-2*dr, 3-s-2*dc)."""
    Ci, Co = w_up.shape[0], w_up.shape[1]
    phases = []
    for r in range(2):
        for s in range(2):
            th = jnp.array([3 - r - 2 * dr for dr in range(2)])
            tw = jnp.array([3 - s - 2 * dc for dc in range(2)])
            sub = jnp.take(jnp.take(w_up, th, axis=2), tw, axis=3)   # (Ci, Co, 2, 2)
            phases.append(sub.transpose(1, 0, 2, 3).reshape(Co, Ci * 4))
    return jnp.stack(phases, axis=0)                          # (4, Co, Ci*4)


def unet_innermost_forward(x, params, eps=1e-5):
    w_down, w_up = params["w_down"], params["w_up"]           # (inner,in,4,4), (inner,outer,4,4)
    gamma, beta = params["gamma"], params["beta"]
    N, Cin, H, W = x.shape
    inner_nc = w_down.shape[0]
    outer_nc = w_up.shape[1]

    # ---- down: LeakyReLU(0.2) fused in-kernel + Conv2d(k=4, s=2, p=1, bias=False)
    patches, Hd, Wd = im2col_cm(x, k=4, stride=2, pad=1)      # (Cin*16, N*Hd*Wd)
    d_cm = down_conv_matmul(w_down.reshape(inner_nc, -1), patches)   # (inner_nc, M)

    # ---- up: ReLU fused in-kernel + polyphase ConvTranspose2d(k=4, s=2, p=1, bias=False)
    #      with BatchNorm sum/sumsq accumulated in the same kernel
    patch_ph = polyphase_up_patches(d_cm, N, Hd, Wd)          # (4, inner_nc*4, M)
    w_ph = polyphase_up_weights(w_up)                         # (4, outer_nc, inner_nc*4)
    u, s, ssq, M = up_conv_with_bn_stats(w_ph, patch_ph)

    # ---- BatchNorm2d(outer_nc): train-mode (biased) statistics, affine gamma/beta
    count = 4.0 * M                                           # = N * H * W real pixels
    mean = s / count
    var = ssq / count - mean * mean
    inv = jax.lax.rsqrt(var + eps)
    scale = gamma.reshape(-1, 1) * inv
    offset = beta.reshape(-1, 1) - mean * scale
    y = bn_apply(u, scale, offset)[:, :, :M]                  # (4, outer_nc, M)

    # ---- interleave phases back to NCHW + skip connection cat([x, y], dim=1)
    # TODO(synk): write y straight into the channel-offset half of a preallocated output
    #             (input_output_aliases) instead of interleave + concatenate.
    y = y.reshape(2, 2, outer_nc, N, Hd, Wd).transpose(3, 2, 4, 0, 5, 1)
    y = y.reshape(N, outer_nc, 2 * Hd, 2 * Wd)
    return jnp.concatenate([x, y], axis=1)


# ----------------------------------------------------------------------------
# Pure-JAX reference (correctness check only)
# ----------------------------------------------------------------------------
def ref_forward(x, params):
    w_down, w_up = params["w_down"], params["w_up"]
    gamma, beta = params["gamma"], params["beta"]
    h = jnp.where(x >= 0, x, 0.2 * x)
    d = jax.lax.conv_general_dilated(
        h, w_down, (2, 2), ((1, 1), (1, 1)),
        dimension_numbers=("NCHW", "OIHW", "NCHW"),
        precision=jax.lax.Precision.HIGHEST)
    r = jnp.maximum(d, 0.0)
    w_conv = jnp.flip(w_up, axis=(2, 3)).transpose(1, 0, 2, 3)
    u = jax.lax.conv_general_dilated(
        r, w_conv, (1, 1), ((2, 2), (2, 2)), lhs_dilation=(2, 2),
        dimension_numbers=("NCHW", "OIHW", "NCHW"),
        precision=jax.lax.Precision.HIGHEST)
    mean = u.mean(axis=(0, 2, 3), keepdims=True)
    var = ((u - mean) ** 2).mean(axis=(0, 2, 3), keepdims=True)
    y = (u - mean) * jax.lax.rsqrt(var + 1e-5) * gamma.reshape(1, -1, 1, 1) \
        + beta.reshape(1, -1, 1, 1)
    return jnp.concatenate([x, y], axis=1)


if __name__ == "__main__":
    key = jax.random.PRNGKey(0)
    kx, kd, ku = jax.random.split(key, 3)

    # innermost block: input_nc = outer_nc (input_nc=None in the PyTorch module)
    N, outer_nc, inner_nc, H, W = 2, 4, 8, 16, 16
    input_nc = outer_nc

    x = jax.random.normal(kx, (N, input_nc, H, W), jnp.float32)
    params = dict(
        # Conv2d(input_nc, inner_nc, k=4, s=2, p=1, bias=False): weight (inner, in, 4, 4)
        w_down=0.05 * jax.random.normal(kd, (inner_nc, input_nc, 4, 4), jnp.float32),
        # ConvTranspose2d(inner_nc, outer_nc, k=4, s=2, p=1, bias=False): weight (inner, outer, 4, 4)
        w_up=0.05 * jax.random.normal(ku, (inner_nc, outer_nc, 4, 4), jnp.float32),
        # BatchNorm2d(outer_nc) affine params (default init)
        gamma=jnp.ones((outer_nc,), jnp.float32),
        beta=jnp.zeros((outer_nc,), jnp.float32),
    )

    out = jax.jit(unet_innermost_forward)(x, params)
    out = jax.block_until_ready(out)

    assert out.shape == (N, input_nc + outer_nc, H, W), out.shape
    ref = ref_forward(x, params)
    err = float(jnp.max(jnp.abs(out - ref)))
    assert err < 1e-2, f"max abs err vs reference: {err}"

    print("KERNEL_OK")
</pallas_src>

<mosaic_0001>
module attributes {stable_mosaic.version = 11 : i64} {
  func.func @_down_conv_kernel(%arg0: i32, %arg1: i32, %arg2: memref<8x64xf32, #tpu.memory_space<vmem>>, %arg3: memref<64x128xf32, #tpu.memory_space<vmem>>, %arg4: memref<8x128xf32, #tpu.memory_space<vmem>>, %arg5: memref<8x128xf32, #tpu.memory_space<vmem>>) attributes {dimension_semantics = [#tpu.dimension_semantics<parallel>, #tpu.dimension_semantics<arbitrary>], iteration_bounds = array<i64: 1, 1>, scalar_prefetch = 0 : i64, scratch_operands = 1 : i64, tpu.core_type = #tpu.core_type<tc>, window_params = [{transform_indices = @transform_0, window_bounds = array<i64: 8, 64>}, {transform_indices = @transform_1, window_bounds = array<i64: 64, 128>}, {transform_indices = @transform_2, window_bounds = array<i64: 8, 128>}]} {
    %c0_i32 = arith.constant 0 : i32
    %0 = arith.cmpi eq, %arg1, %c0_i32 : i32
    %1 = arith.extui %0 : i1 to i32
    %c0_i32_0 = arith.constant 0 : i32
    %2 = arith.cmpi ne, %1, %c0_i32_0 : i32
    scf.if %2 {
      %cst_12 = arith.constant 0.000000e+00 : f32
      %17 = vector.broadcast %cst_12 : f32 to vector<8x128xf32>
      %c0_13 = arith.constant 0 : index
      %c0_14 = arith.constant 0 : index
      %18 = vector.load %arg5[%c0_13, %c0_14] : memref<8x128xf32, #tpu.memory_space<vmem>>, vector<8x128xf32>
      tpu.vector_store %arg5[%c0_13, %c0_14], %17 {strides = array<i32>} : memref<8x128xf32, #tpu.memory_space<vmem>>, vector<8x128xf32>,
    } else {
    }
    %c0 = arith.constant 0 : index
    %c0_1 = arith.constant 0 : index
    %3 = vector.load %arg3[%c0, %c0_1] : memref<64x128xf32, #tpu.memory_space<vmem>>, vector<64x128xf32>
    %cst = arith.constant 0.000000e+00 : f32
    %4 = vector.broadcast %cst : f32 to vector<64x128xf32>
    %5 = arith.cmpf oge, %3, %4 : vector<64x128xf32>
    %cst_2 = arith.constant 2.000000e-01 : f32
    %6 = vector.broadcast %cst_2 : f32 to vector<64x128xf32>
    %7 = arith.mulf %6, %3 : vector<64x128xf32>
    %8 = arith.select %5, %3, %7 : vector<64x128xi1>, vector<64x128xf32>
    %c0_3 = arith.constant 0 : index
    %c0_4 = arith.constant 0 : index
    %9 = vector.load %arg5[%c0_3, %c0_4] : memref<8x128xf32, #tpu.memory_space<vmem>>, vector<8x128xf32>
    %c0_5 = arith.constant 0 : index
    %c0_6 = arith.constant 0 : index
    %10 = vector.load %arg2[%c0_5, %c0_6] : memref<8x64xf32, #tpu.memory_space<vmem>>, vector<8x64xf32>
    %cst_7 = arith.constant dense<0.000000e+00> : vector<8x128xf32>
    %11 = tpu.matmul %10, %8, %cst_7 {dimension_numbers = #tpu.dot_dimension_numbers<[1], [0], [0], [1], [0, 0, 1, 1], [], []>} : vector<8x64xf32>, vector<64x128xf32>, vector<8x128xf32> -> vector<8x128xf32>
    %12 = arith.addf %9, %11 : vector<8x128xf32>
    %c0_8 = arith.constant 0 : index
    %c0_9 = arith.constant 0 : index
    %13 = vector.load %arg5[%c0_8, %c0_9] : memref<8x128xf32, #tpu.memory_space<vmem>>, vector<8x128xf32>
    tpu.vector_store %arg5[%c0_8, %c0_9], %12 {strides = array<i32>} : memref<8x128xf32, #tpu.memory_space<vmem>>, vector<8x128xf32>,
    %c0_i32_10 = arith.constant 0 : i32
    %14 = arith.cmpi eq, %arg1, %c0_i32_10 : i32
    %15 = arith.extui %14 : i1 to i32
    %c0_i32_11 = arith.constant 0 : i32
    %16 = arith.cmpi ne, %15, %c0_i32_11 : i32
    scf.if %16 {
      %c0_12 = arith.constant 0 : index
      %c0_13 = arith.constant 0 : index
      %17 = vector.load %arg5[%c0_12, %c0_13] : memref<8x128xf32, #tpu.memory_space<vmem>>, vector<8x128xf32>
      %c0_14 = arith.constant 0 : index
      %c0_15 = arith.constant 0 : index
      %18 = vector.load %arg4[%c0_14, %c0_15] : memref<8x128xf32, #tpu.memory_space<vmem>>, vector<8x128xf32>
      tpu.vector_store %arg4[%c0_14, %c0_15], %17 {strides = array<i32>} : memref<8x128xf32, #tpu.memory_space<vmem>>, vector<8x128xf32>,
    } else {
    }
    return
  }
  func.func @transform_0(%arg0: i32, %arg1: i32) -> (i32, i32) {
    %c0_i32 = arith.constant 0 : i32
    %c0_i32_0 = arith.constant 0 : i32
    return %c0_i32, %arg1 : i32, i32
  }
  func.func @transform_1(%arg0: i32, %arg1: i32) -> (i32, i32) {
    %c0_i32 = arith.constant 0 : i32
    return %arg1, %arg0 : i32, i32
  }
  func.func @transform_2(%arg0: i32, %arg1: i32) -> (i32, i32) {
    %c0_i32 = arith.constant 0 : i32
    %c0_i32_0 = arith.constant 0 : i32
    return %c0_i32, %arg0 : i32, i32
  }
}

module attributes {stable_mosaic.version = 11 : i64} {
  func.func @_up_conv_bn_stats_kernel(%arg0: i32, %arg1: i32, %arg2: i32, %arg3: memref<1x4x32xf32, #tpu.memory_space<vmem>>, %arg4: memref<1x32x128xf32, #tpu.memory_space<vmem>>, %arg5: memref<1x4x128xf32, #tpu.memory_space<vmem>>, %arg6: memref<4x1xf32, #tpu.memory_space<vmem>>, %arg7: memref<4x1xf32, #tpu.memory_space<vmem>>, %arg8: memref<4x128xf32, #tpu.memory_space<vmem>>) attributes {dimension_semantics = [#tpu.dimension_semantics<arbitrary>, #tpu.dimension_semantics<arbitrary>, #tpu.dimension_semantics<arbitrary>], iteration_bounds = array<i64: 4, 1, 1>, scalar_prefetch = 0 : i64, scratch_operands = 1 : i64, tpu.core_type = #tpu.core_type<tc>, window_params = [{transform_indices = @transform_0, window_bounds = array<i64: 1, 4, 32>}, {transform_indices = @transform_1, window_bounds = array<i64: 1, 32, 128>}, {transform_indices = @transform_2, window_bounds = array<i64: 1, 4, 128>}, {pipeline_mode = #tpu.pipeline_mode<synchronous>, transform_indices = @transform_3, window_bounds = array<i64: 4, 1>}, {pipeline_mode = #tpu.pipeline_mode<synchronous>, transform_indices = @transform_4, window_bounds = array<i64: 4, 1>}]} {
    %c0_i32 = arith.constant 0 : i32
    %0 = arith.cmpi eq, %arg0, %c0_i32 : i32
    %c0_i32_0 = arith.constant 0 : i32
    %1 = arith.cmpi eq, %arg1, %c0_i32_0 : i32
    %2 = arith.andi %0, %1 : i1
    %c0_i32_1 = arith.constant 0 : i32
    %3 = arith.cmpi eq, %arg2, %c0_i32_1 : i32
    %4 = arith.andi %2, %3 : i1
    %5 = arith.extui %4 : i1 to i32
    %c0_i32_2 = arith.constant 0 : i32
    %6 = arith.cmpi ne, %5, %c0_i32_2 : i32
    scf.if %6 {
      %cst_17 = arith.constant 0.000000e+00 : f32
      %23 = vector.broadcast %cst_17 : f32 to vector<4x1xf32>
      %c0_18 = arith.constant 0 : index
      %c0_19 = arith.constant 0 : index
      %24 = vector.load %arg6[%c0_18, %c0_19] : memref<4x1xf32, #tpu.memory_space<vmem>>, vector<4x1xf32>
      tpu.vector_store %arg6[%c0_18, %c0_19], %23 {strides = array<i32>} : memref<4x1xf32, #tpu.memory_space<vmem>>, vector<4x1xf32>,
      %cst_20 = arith.constant 0.000000e+00 : f32
      %25 = vector.broadcast %cst_20 : f32 to vector<4x1xf32>
      %c0_21 = arith.constant 0 : index
      %c0_22 = arith.constant 0 : index
      %26 = vector.load %arg7[%c0_21, %c0_22] : memref<4x1xf32, #tpu.memory_space<vmem>>, vector<4x1xf32>
      tpu.vector_store %arg7[%c0_21, %c0_22], %25 {strides = array<i32>} : memref<4x1xf32, #tpu.memory_space<vmem>>, vector<4x1xf32>,
    } else {
    }
    %c0_i32_3 = arith.constant 0 : i32
    %7 = arith.cmpi eq, %arg2, %c0_i32_3 : i32
    %8 = arith.extui %7 : i1 to i32
    %c0_i32_4 = arith.constant 0 : i32
    %9 = arith.cmpi ne, %8, %c0_i32_4 : i32
    scf.if %9 {
      %cst_17 = arith.constant 0.000000e+00 : f32
      %23 = vector.broadcast %cst_17 : f32 to vector<4x128xf32>
      %c0_18 = arith.constant 0 : index
      %c0_19 = arith.constant 0 : index
      %24 = vector.load %arg8[%c0_18, %c0_19] : memref<4x128xf32, #tpu.memory_space<vmem>>, vector<4x128xf32>
      tpu.vector_store %arg8[%c0_18, %c0_19], %23 {strides = array<i32>} : memref<4x128xf32, #tpu.memory_space<vmem>>, vector<4x128xf32>,
    } else {
    }
    %c0 = arith.constant 0 : index
    %c0_5 = arith.constant 0 : index
    %c0_6 = arith.constant 0 : index
    %10 = vector.load %arg4[%c0, %c0_5, %c0_6] : memref<1x32x128xf32, #tpu.memory_space<vmem>>, vector<1x32x128xf32>
    %11 = vector.shape_cast %10 : vector<1x32x128xf32> to vector<32x128xf32>
    %cst = arith.constant 0.000000e+00 : f32
    %12 = vector.broadcast %cst : f32 to vector<32x128xf32>
    %13 = arith.maximumf %11, %12 : vector<32x128xf32>
    %c0_7 = arith.constant 0 : index
    %c0_8 = arith.constant 0 : index
    %14 = vector.load %arg8[%c0_7, %c0_8] : memref<4x128xf32, #tpu.memory_space<vmem>>, vector<4x128xf32>
    %c0_9 = arith.constant 0 : index
    %c0_10 = arith.constant 0 : index
    %c0_11 = arith.constant 0 : index
    %15 = vector.load %arg3[%c0_9, %c0_10, %c0_11] : memref<1x4x32xf32, #tpu.memory_space<vmem>>, vector<1x4x32xf32>
    %16 = vector.shape_cast %15 : vector<1x4x32xf32> to vector<4x32xf32>
    %cst_12 = arith.constant dense<0.000000e+00> : vector<4x128xf32>
    %17 = tpu.matmul %16, %13, %cst_12 {dimension_numbers = #tpu.dot_dimension_numbers<[1], [0], [0], [1], [0, 0, 1, 1], [], []>} : vector<4x32xf32>, vector<32x128xf32>, vector<4x128xf32> -> vector<4x128xf32>
    %18 = arith.addf %14, %17 : vector<4x128xf32>
    %c0_13 = arith.constant 0 : index
    %c0_14 = arith.constant 0 : index
    %19 = vector.load %arg8[%c0_13, %c0_14] : memref<4x128xf32, #tpu.memory_space<vmem>>, vector<4x128xf32>
    tpu.vector_store %arg8[%c0_13, %c0_14], %18 {strides = array<i32>} : memref<4x128xf32, #tpu.memory_space<vmem>>, vector<4x128xf32>,
    %c0_i32_15 = arith.constant 0 : i32
    %20 = arith.cmpi eq, %arg2, %c0_i32_15 : i32
    %21 = arith.extui %20 : i1 to i32
    %c0_i32_16 = arith.constant 0 : i32
    %22 = arith.cmpi ne, %21, %c0_i32_16 : i32
    scf.if %22 {
      %c0_17 = arith.constant 0 : index
      %c0_18 = arith.constant 0 : index
      %23 = vector.load %arg8[%c0_17, %c0_18] : memref<4x128xf32, #tpu.memory_space<vmem>>, vector<4x128xf32>
      %c0_19 = arith.constant 0 : index
      %c0_20 = arith.constant 0 : index
      %c0_21 = arith.constant 0 : index
      %24 = vector.load %arg5[%c0_19, %c0_20, %c0_21] : memref<1x4x128xf32, #tpu.memory_space<vmem>>, vector<1x4x128xf32>
      %25 = vector.shape_cast %24 : vector<1x4x128xf32> to vector<4x128xf32>
      %26 = vector.shape_cast %23 : vector<4x128xf32> to vector<1x4x128xf32>
      tpu.vector_store %arg5[%c0_19, %c0_20, %c0_21], %26 {strides = array<i32>} : memref<1x4x128xf32, #tpu.memory_space<vmem>>, vector<1x4x128xf32>,
      %c0_22 = arith.constant 0 : index
      %c0_23 = arith.constant 0 : index
      %27 = vector.load %arg6[%c0_22, %c0_23] : memref<4x1xf32, #tpu.memory_space<vmem>>, vector<4x1xf32>
      %cst_24 = arith.constant dense<0.000000e+00> : vector<4xf32>
      %28 = vector.multi_reduction <add>, %23, %cst_24 [1] : vector<4x128xf32> to vector<4xf32>
      %29 = vector.shape_cast %28 : vector<4xf32> to vector<4x1xf32>
      %30 = arith.addf %27, %29 : vector<4x1xf32>
      %c0_25 = arith.constant 0 : index
      %c0_26 = arith.constant 0 : index
      %31 = vector.load %arg6[%c0_25, %c0_26] : memref<4x1xf32, #tpu.memory_space<vmem>>, vector<4x1xf32>
      tpu.vector_store %arg6[%c0_25, %c0_26], %30 {strides = array<i32>} : memref<4x1xf32, #tpu.memory_space<vmem>>, vector<4x1xf32>,
      %c0_27 = arith.constant 0 : index
      %c0_28 = arith.constant 0 : index
      %32 = vector.load %arg7[%c0_27, %c0_28] : memref<4x1xf32, #tpu.memory_space<vmem>>, vector<4x1xf32>
      %33 = arith.mulf %23, %23 : vector<4x128xf32>
      %cst_29 = arith.constant dense<0.000000e+00> : vector<4xf32>
      %34 = vector.multi_reduction <add>, %33, %cst_29 [1] : vector<4x128xf32> to vector<4xf32>
      %35 = vector.shape_cast %34 : vector<4xf32> to vector<4x1xf32>
      %36 = arith.addf %32, %35 : vector<4x1xf32>
      %c0_30 = arith.constant 0 : index
      %c0_31 = arith.constant 0 : index
      %37 = vector.load %arg7[%c0_30, %c0_31] : memref<4x1xf32, #tpu.memory_space<vmem>>, vector<4x1xf32>
      tpu.vector_store %arg7[%c0_30, %c0_31], %36 {strides = array<i32>} : memref<4x1xf32, #tpu.memory_space<vmem>>, vector<4x1xf32>,
    } else {
    }
    return
  }
  func.func @transform_0(%arg0: i32, %arg1: i32, %arg2: i32) -> (i32, i32, i32) {
    %c0_i32 = arith.constant 0 : i32
    %c0_i32_0 = arith.constant 0 : i32
    return %arg0, %c0_i32, %arg2 : i32, i32, i32
  }
  func.func @transform_1(%arg0: i32, %arg1: i32, %arg2: i32) -> (i32, i32, i32) {
    %c0_i32 = arith.constant 0 : i32
    return %arg0, %arg2, %arg1 : i32, i32, i32
  }
  func.func @transform_2(%arg0: i32, %arg1: i32, %arg2: i32) -> (i32, i32, i32) {
    %c0_i32 = arith.constant 0 : i32
    %c0_i32_0 = arith.constant 0 : i32
    return %arg0, %c0_i32, %arg1 : i32, i32, i32
  }
  func.func @transform_3(%arg0: i32, %arg1: i32, %arg2: i32) -> (i32, i32) {
    %c0_i32 = arith.constant 0 : i32
    %c0_i32_0 = arith.constant 0 : i32
    %c0_i32_1 = arith.constant 0 : i32
    return %c0_i32, %c0_i32_0 : i32, i32
  }
  func.func @transform_4(%arg0: i32, %arg1: i32, %arg2: i32) -> (i32, i32) {
    %c0_i32 = arith.constant 0 : i32
    %c0_i32_0 = arith.constant 0 : i32
    %c0_i32_1 = arith.constant 0 : i32
    return %c0_i32, %c0_i32_0 : i32, i32
  }
}

module attributes {stable_mosaic.version = 11 : i64} {
  func.func @_bn_apply_kernel(%arg0: i32, %arg1: i32, %arg2: memref<1x4x128xf32, #tpu.memory_space<vmem>>, %arg3: memref<4x1xf32, #tpu.memory_space<vmem>>, %arg4: memref<4x1xf32, #tpu.memory_space<vmem>>, %arg5: memref<1x4x128xf32, #tpu.memory_space<vmem>>) attributes {dimension_semantics = [#tpu.dimension_semantics<parallel>, #tpu.dimension_semantics<parallel>], iteration_bounds = array<i64: 4, 1>, scalar_prefetch = 0 : i64, scratch_operands = 0 : i64, tpu.core_type = #tpu.core_type<tc>, window_params = [{transform_indices = @transform_0, window_bounds = array<i64: 1, 4, 128>}, {pipeline_mode = #tpu.pipeline_mode<synchronous>, transform_indices = @transform_1, window_bounds = array<i64: 4, 1>}, {pipeline_mode = #tpu.pipeline_mode<synchronous>, transform_indices = @transform_2, window_bounds = array<i64: 4, 1>}, {transform_indices = @transform_3, window_bounds = array<i64: 1, 4, 128>}]} {
    %c0 = arith.constant 0 : index
    %c0_0 = arith.constant 0 : index
    %c0_1 = arith.constant 0 : index
    %0 = vector.load %arg2[%c0, %c0_0, %c0_1] : memref<1x4x128xf32, #tpu.memory_space<vmem>>, vector<1x4x128xf32>
    %1 = vector.shape_cast %0 : vector<1x4x128xf32> to vector<4x128xf32>
    %c0_2 = arith.constant 0 : index
    %c0_3 = arith.constant 0 : index
    %2 = vector.load %arg3[%c0_2, %c0_3] : memref<4x1xf32, #tpu.memory_space<vmem>>, vector<4x1xf32>
    %3 = vector.broadcast %2 : vector<4x1xf32> to vector<4x128xf32>
    %4 = arith.mulf %1, %3 : vector<4x128xf32>
    %c0_4 = arith.constant 0 : index
    %c0_5 = arith.constant 0 : index
    %5 = vector.load %arg4[%c0_4, %c0_5] : memref<4x1xf32, #tpu.memory_space<vmem>>, vector<4x1xf32>
    %6 = vector.broadcast %5 : vector<4x1xf32> to vector<4x128xf32>
    %7 = arith.addf %4, %6 : vector<4x128xf32>
    %c0_6 = arith.constant 0 : index
    %c0_7 = arith.constant 0 : index
    %c0_8 = arith.constant 0 : index
    %8 = vector.load %arg5[%c0_6, %c0_7, %c0_8] : memref<1x4x128xf32, #tpu.memory_space<vmem>>, vector<1x4x128xf32>
    %9 = vector.shape_cast %8 : vector<1x4x128xf32> to vector<4x128xf32>
    %10 = vector.shape_cast %7 : vector<4x128xf32> to vector<1x4x128xf32>
    tpu.vector_store %arg5[%c0_6, %c0_7, %c0_8], %10 {strides = array<i32>} : memref<1x4x128xf32, #tpu.memory_space<vmem>>, vector<1x4x128xf32>,
    return
  }
  func.func @transform_0(%arg0: i32, %arg1: i32) -> (i32, i32, i32) {
    %c0_i32 = arith.constant 0 : i32
    %c0_i32_0 = arith.constant 0 : i32
    return %arg0, %c0_i32, %arg1 : i32, i32, i32
  }
  func.func @transform_1(%arg0: i32, %arg1: i32) -> (i32, i32) {
    %c0_i32 = arith.constant 0 : i32
    %c0_i32_0 = arith.constant 0 : i32
    %c0_i32_1 = arith.constant 0 : i32
    return %c0_i32, %c0_i32_0 : i32, i32
  }
  func.func @transform_2(%arg0: i32, %arg1: i32) -> (i32, i32) {
    %c0_i32 = arith.constant 0 : i32
    %c0_i32_0 = arith.constant 0 : i32
    %c0_i32_1 = arith.constant 0 : i32
    return %c0_i32, %c0_i32_0 : i32, i32
  }
  func.func @transform_3(%arg0: i32, %arg1: i32) -> (i32, i32, i32) {
    %c0_i32 = arith.constant 0 : i32
    %c0_i32_0 = arith.constant 0 : i32
    return %arg0, %c0_i32, %arg1 : i32, i32, i32
  }
}

</mosaic_0001>

<llo_original>
// kernel: unet_innermost_forward.3
$region0: #{unet_innermost_forward.3}
  #allocation0 [shape = 'u32[]', space=smem, size = 0x4, offset = 0x4, fixed_abs, tag = 'smem constant byte address 0x4 - core index']
  #allocation1 [shape = 'u32[144,128]{1,0:T(1,128)}', space=vmem, size = 0x12000, scoped, tag = 'internal scratch']
  #allocation2 [shape = 'f32[8,128]{1,0:T(8,128)}', space=vmem, size = 0x1000, scoped, tag = 'scratch operand']
  %s0 = inlined_call_operand.vmem [shape: f32[8,64], index: 0, kind: input, shape index: {}]
  %s1 = inlined_call_operand.vmem [shape: f32[64,128], index: 1, kind: input, shape index: {}]
  %s2 = inlined_call_operand.vmem [shape: f32[8,128], index: 2, kind: output, shape index: {}]
  %s3 = sld [smem:[#allocation0]]
  $region26: #{unet_innermost_forward.3} parent=0
    _
  %s5 = ssub.s32 1, %s3
  %s6 = scalar_select 0, %s5, %s3
  // Predicated region
  $region2: #{unet_innermost_forward.3} parent=0 // pred_check
    _
  $region3: #{unet_innermost_forward.3} parent=0 // pred_check_branch
    %8 = sbr.rel (0) target = $region5
  $region4: #{unet_innermost_forward.3} parent=0 // pred_region
    _
  $region5: #{unet_innermost_forward.3} parent=0 // pred_fallthru
    _
  // Predicated region
  $region6: #{unet_innermost_forward.3} parent=0 // pred_check
    _
  $region7: #{unet_innermost_forward.3} parent=0 // pred_check_branch
    %10 = sbr.rel (0) target = $region9
  $region8: #{unet_innermost_forward.3} parent=0 // pred_region
    _
  $region9: #{unet_innermost_forward.3} parent=0 // pred_fallthru
    _
  %p11 = scmp.eq.s32.totalorder 0, 0
  // Predicated region
  $region10: #{unet_innermost_forward.3} parent=0 // pred_check
    %p12 = pneg %p11
  $region11: #{unet_innermost_forward.3} parent=0 // pred_check_branch
    %14 = sbr.rel (%p12) target = $region13
  $region12: #{unet_innermost_forward.3} parent=0 // pred_region
    %15 = vst [vmem:[#allocation2] sm:$0xff] 0.0
  $region13: #{unet_innermost_forward.3} parent=0 // pred_fallthru
    _
  %v16 = vld [vmem:[%s1] sm:$0xff]
  %v17 = vld [vmem:[%s1 + $0x8] sm:$0xff]
  %v18 = vld [vmem:[%s1 + $0x10] sm:$0xff]
  %v19 = vld [vmem:[%s1 + $0x18] sm:$0xff]
  %v20 = vld [vmem:[%s1 + $0x20] sm:$0xff]
  %v21 = vld [vmem:[%s1 + $0x28] sm:$0xff]
  %v22 = vld [vmem:[%s1 + $0x30] sm:$0xff]
  %v23 = vld [vmem:[%s1 + $0x38] sm:$0xff]
  %vm24 = vcmp.ge.f32.partialorder %v16, 0.0
  %vm25 = vcmp.ge.f32.partialorder %v17, 0.0
  %vm26 = vcmp.ge.f32.partialorder %v18, 0.0
  %vm27 = vcmp.ge.f32.partialorder %v19, 0.0
  %vm28 = vcmp.ge.f32.partialorder %v20, 0.0
  %vm29 = vcmp.ge.f32.partialorder %v21, 0.0
  %vm30 = vcmp.ge.f32.partialorder %v22, 0.0
  %vm31 = vcmp.ge.f32.partialorder %v23, 0.0
  %v32 = vmul.f32 %v16, 0.2
  %v33 = vmul.f32 %v17, 0.2
  %v34 = vmul.f32 %v18, 0.2
  %v35 = vmul.f32 %v19, 0.2
  %v36 = vmul.f32 %v20, 0.2
  %v37 = vmul.f32 %v21, 0.2
  %v38 = vmul.f32 %v22, 0.2
  %v39 = vmul.f32 %v23, 0.2
  %v40 = vsel %vm24, %v16, %v32
  %v41 = vsel %vm25, %v17, %v33
  %v42 = vsel %vm26, %v18, %v34
  %v43 = vsel %vm27, %v19, %v35
  %v44 = vsel %vm28, %v20, %v36
  %v45 = vsel %vm29, %v21, %v37
  %v46 = vsel %vm30, %v22, %v38
  %v47 = vsel %vm31, %v23, %v39
  %v48 = vld [vmem:[#allocation2] sm:$0xff]
  %v49 = vld [vmem:[%s0] sm:$0xff]
  %vm50 = vcmask 523264
  %v52 = vsel %vm50, %v49, 0
  %54 = vmatprep.subr.mxu0 0.0
  %55 = vmatpush1.msra.mxu0 0.0
  %56 = vmatprep.subr.mxu0 0.0
  %57 = vmatpush1.msra.mxu0 0.0
  %58 = vmatprep.subr.mxu0 0.0
  %59 = vmatpush1.msra.mxu0 0.0
  %60 = vmatprep.subr.mxu0 0.0
  %61 = vmatpush1.msra.mxu0 0.0
  %62 = vmatprep.subr.mxu0 0.0
  %63 = vmatpush1.msra.mxu0 0.0
  %64 = vmatprep.subr.mxu0 0.0
  %65 = vmatpush1.msra.mxu0 0.0
  %66 = vmatprep.subr.mxu0 0.0
  %67 = vmatpush1.msra.mxu0 0.0
  %68 = vmatprep.subr.mxu0 0.0
  %69 = vmatpush1.msra.mxu0 0.0
  %70 = vmatprep.subr.mxu0 0.0
  %71 = vmatpush1.msra.mxu0 %v47
  %72 = vmatprep.subr.mxu0 0.0
  %73 = vmatpush1.msra.mxu0 %v46
  %74 = vmatprep.subr.mxu0 0.0
  %75 = vmatpush1.msra.mxu0 %v45
  %76 = vmatprep.subr.mxu0 0.0
  %77 = vmatpush1.msra.mxu0 %v44
  %78 = vmatprep.subr.mxu0 0.0
  %79 = vmatpush1.msra.mxu0 %v43
  %80 = vmatprep.subr.mxu0 0.0
  %81 = vmatpush1.msra.mxu0 %v42
  %82 = vmatprep.subr.mxu0 0.0
  %83 = vmatpush1.msra.mxu0 %v41
  %84 = vmatprep.subr.mxu0 0.0
  %85 = vmatpush1.msra.mxu0 %v40
  %86 = vmatprep.subr.mxu0 0.0
  %87 = vmatpush2.msra.mxu0 0.0
  %88 = vmatprep.subr.mxu0 0.0
  %89 = vmatpush2.msra.mxu0 0.0
  %90 = vmatprep.subr.mxu0 0.0
  %91 = vmatpush2.msra.mxu0 0.0
  %92 = vmatprep.subr.mxu0 0.0
  %93 = vmatpush2.msra.mxu0 0.0
  %94 = vmatprep.subr.mxu0 0.0
  %95 = vmatpush2.msra.mxu0 0.0
  %96 = vmatprep.subr.mxu0 0.0
  %97 = vmatpush2.msra.mxu0 0.0
  %98 = vmatprep.subr.mxu0 0.0
  %99 = vmatpush2.msra.mxu0 0.0
  %100 = vmatprep.subr.mxu0 0.0
  %101 = vmatpush2.msra.mxu0 0.0
  %102 = vmatprep.subr.mxu0 0.0
  %103 = vmatpush2.msra.mxu0 0.0
  %104 = vmatprep.subr.mxu0 0.0
  %105 = vmatpush2.msra.mxu0 0.0
  %106 = vmatprep.subr.mxu0 0.0
  %107 = vmatpush2.msra.mxu0 0.0
  %108 = vmatprep.subr.mxu0 0.0
  %109 = vmatpush2.msra.mxu0 0.0
  %110 = vmatprep.subr.mxu0 0.0
  %111 = vmatpush2.msra.mxu0 0.0
  %112 = vmatprep.subr.mxu0 0.0
  %113 = vmatpush2.msra.mxu0 0.0
  %114 = vmatprep.subr.mxu0 0.0
  %115 = vmatpush2.msra.mxu0 0.0
  %116 = vmatprep.subr.mxu0 0.0
  %117 = vmatpush2.msra.mxu0 0.0
  %118 = vmatprep.mubr.f32.mxu0 0.0
  %119 = vmatmul.mubr.f32.gmra.mxu0 %v52
  %v120 = vpop.f32.mrf.mxu0
  %v121 = vadd.f32 0.0, %v120
  %v122 = vpop.f32.mrf.mxu0
  %123 = vdwg.mxu0
  %v124 = vadd.f32 %v48, %v121
  %125 = vst [vmem:[#allocation2] sm:$0xff] %v124
  // Predicated region
  $region14: #{unet_innermost_forward.3} parent=0 // pred_check
    %p126 = pneg %p11
  $region15: #{unet_innermost_forward.3} parent=0 // pred_check_branch
    %128 = sbr.rel (%p126) target = $region17
  $region16: #{unet_innermost_forward.3} parent=0 // pred_region
    %v129 = vld [vmem:[#allocation2] sm:$0xff]
    %130 = vst [vmem:[%s2] sm:$0xff] %v129
  $region17: #{unet_innermost_forward.3} parent=0 // pred_fallthru
    _
  // Predicated region
  $region18: #{unet_innermost_forward.3} parent=0 // pred_check
    _
  $region19: #{unet_innermost_forward.3} parent=0 // pred_check_branch
    %132 = sbr.rel (0) target = $region21
  $region20: #{unet_innermost_forward.3} parent=0 // pred_region
    _
  $region21: #{unet_innermost_forward.3} parent=0 // pred_fallthru
    _
  // Predicated region
  $region22: #{unet_innermost_forward.3} parent=0 // pred_check
    _
  $region23: #{unet_innermost_forward.3} parent=0 // pred_check_branch
    %134 = sbr.rel (0) target = $region25
  $region24: #{unet_innermost_forward.3} parent=0 // pred_region
    _
  $region25: #{unet_innermost_forward.3} parent=0 // pred_fallthru
    _

// kernel: unet_innermost_forward.5
$region0: #{unet_innermost_forward.5}
  #allocation0 [shape = 'u32[]', space=smem, size = 0x4, offset = 0x4, fixed_abs, tag = 'smem constant byte address 0x4 - core index']
  #allocation1 [shape = 'u32[144,128]{1,0:T(1,128)}', space=vmem, size = 0x12000, scoped, tag = 'internal scratch']
  %s0 = inlined_call_operand.vmem [shape: f32[4,4,128], index: 0, kind: input, shape index: {}]
  %s1 = inlined_call_operand.vmem [shape: f32[4,1], index: 1, kind: input, shape index: {}]
  %s2 = inlined_call_operand.vmem [shape: f32[4,1], index: 2, kind: input, shape index: {}]
  %s3 = inlined_call_operand.vmem [shape: f32[4,4,128], index: 3, kind: output, shape index: {}]
  %s4 = sld [smem:[#allocation0]]
  $region45: #{unet_innermost_forward.5} parent=0
    _
  %s6 = ssub.s32 1, %s4
  %s7 = scalar_select 0, %s6, %s4
  loop: start=0, step=1, limit=6
  $region2: #{unet_innermost_forward.5} parent=0 // loop_pre_header
    _
  $region3: #{unet_innermost_forward.5} parent=0 // loop_header
    %s9 = sphi 0, %s13
    %p10 = scmp.ge.s32.totalorder %s9, 6
    %s16 = sphi 0, %s28
    %s17 = sphi 0, %s24
    %s18 = sphi 0, %s16
    %s19 = sphi 0, %s17
    %s20 = sphi 0, %s18
    %s21 = sphi 0, %s19
    %s33 = sphi 0, %s35
    %s36 = sphi 0, %s33
    %s37 = sphi 0, %s36
    %s53 = sphi 0, %s37
    %s57 = sphi 0, %s57
    %s59 = sphi 0, %s57
    %s60 = sphi 0, %s59
    %s74 = sphi 0, %s60
    %s78 = sphi 0, %s78
    %s80 = sphi 0, %s78
    %s81 = sphi 0, %s80
    %s95 = sphi 0, %s81
    %s103 = sphi 0, %s105
    %s106 = sphi 0, %s103
    %s107 = sphi 0, %s106
    %s123 = sphi 0, %s107
  $region4: #{unet_innermost_forward.5} parent=0 // loop_header_branch
    %12 = sbr.rel (%p10) target = $region8
  $region5: #{unet_innermost_forward.5} parent=0 // loop_body
    %s14 = ssub.s32 %s9, 1
    %s15 = ssub.s32 %s9, 2
    %s22 = sadd.s32 1, %s17
    %p23 = scmp.ge.s32.totalorder %s22, 1
    %s24 = scalar_select %p23, 0, %s22
    %s25 = sadd.s32 1, %s16
    %s26 = scalar_select %p23, %s25, %s16
    %p27 = scmp.ge.s32.totalorder %s26, 4
    %s28 = scalar_select %p27, 0, %s26
    %s29 = ssub.s32 %s16, %s28
    %s30 = ssub.s32 %s17, %s24
    %s31 = sor.u32 %s29, %s30
    %p32 = scmp.eq.s32.totalorder %s31, 0
    %s34 = sadd.s32 %s33, 1
    %s35 = scalar_select %p32, %s33, %s34
    %p38 = pneg %p32
    %p39 = scmp.eq.s32.totalorder %s9, 3
    %p40 = por %p38, %p39
    %p41 = scmp.ne.s32.totalorder %s33, %s36
    %p42 = scmp.eq.s32.totalorder %s9, 0
    %p43 = por %p41, %p42
    %p44 = scmp.ne.s32.totalorder %s33, %s36
    %p45 = scmp.eq.s32.totalorder %s14, 3
    %p46 = por %p44, %p45
    %p47 = scmp.ne.s32.totalorder %s36, %s37
    %p48 = scmp.eq.s32.totalorder %s14, 0
    %p49 = por %p47, %p48
    %p50 = scmp.ne.s32.totalorder %s36, %s37
    %p51 = scmp.eq.s32.totalorder %s15, 3
    %p52 = por %p50, %p51
    %p54 = scmp.ne.s32.totalorder %s37, %s53
    %p55 = scmp.eq.s32.totalorder %s15, 0
    %p56 = por %p54, %p55
    %s58 = sadd.s32 %s57, 1
    %p61 = scmp.eq.s32.totalorder %s9, 3
    %p62 = scmp.ne.s32.totalorder %s57, %s59
    %p63 = scmp.eq.s32.totalorder %s9, 0
    %p64 = por %p62, %p63
    %p65 = scmp.ne.s32.totalorder %s57, %s59
    %p66 = scmp.eq.s32.totalorder %s14, 3
    %p67 = por %p65, %p66
    %p68 = scmp.ne.s32.totalorder %s59, %s60
    %p69 = scmp.eq.s32.totalorder %s14, 0
    %p70 = por %p68, %p69
    %p71 = scmp.ne.s32.totalorder %s59, %s60
    %p72 = scmp.eq.s32.totalorder %s15, 3
    %p73 = por %p71, %p72
    %p75 = scmp.ne.s32.totalorder %s60, %s74
    %p76 = scmp.eq.s32.totalorder %s15, 0
    %p77 = por %p75, %p76
    %s79 = sadd.s32 %s78, 1
    %p82 = scmp.eq.s32.totalorder %s9, 3
    %p83 = scmp.ne.s32.totalorder %s78, %s80
    %p84 = scmp.eq.s32.totalorder %s9, 0
    %p85 = por %p83, %p84
    %p86 = scmp.ne.s32.totalorder %s78, %s80
    %p87 = scmp.eq.s32.totalorder %s14, 3
    %p88 = por %p86, %p87
    %p89 = scmp.ne.s32.totalorder %s80, %s81
    %p90 = scmp.eq.s32.totalorder %s14, 0
    %p91 = por %p89, %p90
    %p92 = scmp.ne.s32.totalorder %s80, %s81
    %p93 = scmp.eq.s32.totalorder %s15, 3
    %p94 = por %p92, %p93
    %p96 = scmp.ne.s32.totalorder %s81, %s95
    %p97 = scmp.eq.s32.totalorder %s15, 0
    %p98 = por %p96, %p97
    %s99 = ssub.s32 %s16, %s28
    %s100 = ssub.s32 %s17, %s24
    %s101 = sor.u32 %s99, %s100
    %p102 = scmp.eq.s32.totalorder %s101, 0
    %s104 = sadd.s32 %s103, 1
    %s105 = scalar_select %p102, %s103, %s104
    %p108 = pneg %p102
    %p109 = scmp.eq.s32.totalorder %s9, 3
    %p110 = por %p108, %p109
    %p111 = scmp.ne.s32.totalorder %s103, %s106
    %p112 = scmp.eq.s32.totalorder %s9, 0
    %p113 = por %p111, %p112
    %p114 = scmp.ne.s32.totalorder %s103, %s106
    %p115 = scmp.eq.s32.totalorder %s14, 3
    %p116 = por %p114, %p115
    %p117 = scmp.ne.s32.totalorder %s106, %s107
    %p118 = scmp.eq.s32.totalorder %s14, 0
    %p119 = por %p117, %p118
    %p120 = scmp.ne.s32.totalorder %s106, %s107
    %p121 = scmp.eq.s32.totalorder %s15, 3
    %p122 = por %p120, %p121
    %p124 = scmp.ne.s32.totalorder %s107, %s123
    %p125 = scmp.eq.s32.totalorder %s15, 0
    %p126 = por %p124, %p125
    %p127 = scmp.le.s32.totalorder 1, %s9
    %p128 = scmp.lt.s32.totalorder %s9, 5
    %p129 = pnand %p127, %p128
    %p130 = pneg %p129
    // Predicated region
    $region9: #{unet_innermost_forward.5} parent=5 // pred_check
      _
    $region10: #{unet_innermost_forward.5} parent=5 // pred_check_branch
      %132 = sbr.rel (%p129) target = $region12
    $region11: #{unet_innermost_forward.5} parent=5 // pred_region
      %s133 = ssub.s32 %s9, 1
      // Predicated region
      $region13: #{unet_innermost_forward.5} parent=11 // pred_check
        %p134 = pneg %p70
      $region14: #{unet_innermost_forward.5} parent=11 // pred_check_branch
        %136 = sbr.rel (%p134) target = $region16
      $region15: #{unet_innermost_forward.5} parent=11 // pred_region
        _
      $region16: #{unet_innermost_forward.5} parent=11 // pred_fallthru
        _
      // Predicated region
      $region17: #{unet_innermost_forward.5} parent=11 // pred_check
        %p137 = pneg %p91
      $region18: #{unet_innermost_forward.5} parent=11 // pred_check_branch
        %139 = sbr.rel (%p137) target = $region20
      $region19: #{unet_innermost_forward.5} parent=11 // pred_region
        _
      $region20: #{unet_innermost_forward.5} parent=11 // pred_fallthru
        _
    $region12: #{unet_innermost_forward.5} parent=5 // pred_fallthru
      _
    %p140 = scmp.lt.s32.totalorder %s9, 4
    // Predicated region
    $region21: #{unet_innermost_forward.5} parent=5 // pred_check
      %p141 = pneg %p140
    $region22: #{unet_innermost_forward.5} parent=5 // pred_check_branch
      %143 = sbr.rel (%p141) target = $region24
    $region23: #{unet_innermost_forward.5} parent=5 // pred_region
      // Predicated region
      $region25: #{unet_innermost_forward.5} parent=23 // pred_check
        %p144 = pneg %p43
      $region26: #{unet_innermost_forward.5} parent=23 // pred_check_branch
        %146 = sbr.rel (%p144) target = $region28
      $region27: #{unet_innermost_forward.5} parent=23 // pred_region
        %p147 = scmp.lt.s32.totalorder %s16, 3
        %s148 = scalar_select %p147, %s16, 3
        %p149 = scmp.lt.s32.totalorder %s17, 0
        %s150 = scalar_select %p149, %s17, 0
        %s151 = sadd.s32 %s150, %s148
        %s152 = smul.addr %s151, 4
        %s153 = scalar_lea.vmem %s0, %s152
      $region28: #{unet_innermost_forward.5} parent=23 // pred_fallthru
        _
    $region24: #{unet_innermost_forward.5} parent=5 // pred_fallthru
      _
    %p154 = scmp.le.s32.totalorder 1, %s9
    %p155 = scmp.lt.s32.totalorder %s9, 5
    %p156 = pnand %p154, %p155
    %p157 = pneg %p156
    // Predicated region
    $region29: #{unet_innermost_forward.5} parent=5 // pred_check
      _
    $region30: #{unet_innermost_forward.5} parent=5 // pred_check_branch
      %159 = sbr.rel (%p156) target = $region32
    $region31: #{unet_innermost_forward.5} parent=5 // pred_region
      %s160 = ssub.s32 %s9, 1
      %p161 = scmp.lt.s32.totalorder %s18, 3
      %s162 = scalar_select %p161, %s18, 3
      %p163 = scmp.lt.s32.totalorder %s19, 0
      %s164 = scalar_select %p163, %s19, 0
      %s165 = sadd.s32 %s164, %s162
      %s166 = smul.addr %s165, 4
      %s167 = scalar_lea.vmem %s0, %s166
      %p168 = pneg %p49
      %p169 = pneg %p46
      %p170 = pneg %p70
      %p171 = pneg %p67
      %p172 = pneg %p91
      %p173 = pneg %p88
      %p174 = pneg %p119
      %p175 = pneg %p116
      %p176 = scmp.lt.s32.totalorder %s18, 3
      %s177 = scalar_select %p176, %s18, 3
      %p178 = scmp.lt.s32.totalorder %s19, 0
      %s179 = scalar_select %p178, %s19, 0
      %s180 = sadd.s32 %s179, %s177
      %s181 = smul.addr %s180, 4
      %s182 = scalar_lea.vmem %s3, %s181
      %p183 = scmp.lt.s32.totalorder %s18, 3
      %s184 = scalar_select %p183, %s18, 3
      %p185 = scmp.lt.s32.totalorder %s19, 0
      %s186 = scalar_select %p185, %s19, 0
      %s187 = sadd.s32 %s186, %s184
      %s188 = smul.addr %s187, 4
      %s189 = scalar_lea.vmem %s0, %s188
      %p190 = scmp.lt.s32.totalorder %s18, 3
      %s191 = scalar_select %p190, %s18, 3
      %p192 = scmp.lt.s32.totalorder %s19, 0
      %s193 = scalar_select %p192, %s19, 0
      %s194 = sadd.s32 %s193, %s191
      %s195 = smul.addr %s194, 4
      %s196 = scalar_lea.vmem %s3, %s195
      %v197 = vld [vmem:[%s189] sm:$0xf]
      %v198 = vld [vmem:[%s1] sm:$0xf]
      %200 = vset.pattern.permute.xlu0 0
      %201 = vperm.xlu0 %200, %v198
      %v202 = vpop.permute.xlu0 %201
      %v204 = vmul.f32 %v197, %v202
      %v205 = vld [vmem:[%s2] sm:$0xf]
      %207 = vset.pattern.permute.xlu0 0
      %208 = vperm.xlu0 %207, %v205
      %v209 = vpop.permute.xlu0 %208
      %v211 = vadd.f32 %v204, %v209
      %212 = vst [vmem:[%s196] sm:$0xf] %v211
      %p213 = scmp.lt.s32.totalorder %s18, 3
      %s214 = scalar_select %p213, %s18, 3
      %p215 = scmp.lt.s32.totalorder %s19, 0
      %s216 = scalar_select %p215, %s19, 0
      %s217 = sadd.s32 %s216, %s214
      %s218 = smul.addr %s217, 4
      %s219 = scalar_lea.vmem %s3, %s218
      // Predicated region
      $region33: #{unet_innermost_forward.5} parent=31 // pred_check
        %p220 = pneg %p116
      $region34: #{unet_innermost_forward.5} parent=31 // pred_check_branch
        %222 = sbr.rel (%p220) target = $region36
      $region35: #{unet_innermost_forward.5} parent=31 // pred_region
        _
      $region36: #{unet_innermost_forward.5} parent=31 // pred_fallthru
        _
    $region32: #{unet_innermost_forward.5} parent=5 // pred_fallthru
      _
    %p223 = scmp.le.s32.totalorder 2, %s9
    // Predicated region
    $region37: #{unet_innermost_forward.5} parent=5 // pred_check
      %p224 = pneg %p223
    $region38: #{unet_innermost_forward.5} parent=5 // pred_check_branch
      %226 = sbr.rel (%p224) target = $region40
    $region39: #{unet_innermost_forward.5} parent=5 // pred_region
      %s227 = ssub.s32 %s9, 2
      // Predicated region
      $region41: #{unet_innermost_forward.5} parent=39 // pred_check
        %p228 = pneg %p122
      $region42: #{unet_innermost_forward.5} parent=39 // pred_check_branch
        %230 = sbr.rel (%p228) target = $region44
      $region43: #{unet_innermost_forward.5} parent=39 // pred_region
        %p231 = scmp.lt.s32.totalorder %s20, 3
        %s232 = scalar_select %p231, %s20, 3
        %p233 = scmp.lt.s32.totalorder %s21, 0
        %s234 = scalar_select %p233, %s21, 0
        %s235 = sadd.s32 %s234, %s232
        %s236 = smul.addr %s235, 4
        %s237 = scalar_lea.vmem %s3, %s236
      $region44: #{unet_innermost_forward.5} parent=39 // pred_fallthru
        _
    $region40: #{unet_innermost_forward.5} parent=5 // pred_fallthru
      _
  $region6: #{unet_innermost_forward.5} parent=0 // loop_footer
    %s13 = sadd.s32 1, %s9
  $region7: #{unet_innermost_forward.5} parent=0 // loop_footer_branch
    %8 = sbr.rel target = $region3
  $region8: #{unet_innermost_forward.5} parent=0 // loop_exit
    _

// kernel: unet_innermost_forward.4
$region0: #{unet_innermost_forward.4}
  #allocation0 [shape = 'u32[]', space=smem, size = 0x4, offset = 0x4, fixed_abs, tag = 'smem constant byte address 0x4 - core index']
  #allocation1 [shape = 'u32[144,128]{1,0:T(1,128)}', space=vmem, size = 0x12000, scoped, tag = 'internal scratch']
  #allocation2 [shape = 'f32[4,128]{1,0:T(4,128)}', space=vmem, size = 0x800, scoped, tag = 'scratch operand']
  %s0 = inlined_call_operand.vmem [shape: f32[4,4,32], index: 0, kind: input, shape index: {}]
  %s1 = inlined_call_operand.vmem [shape: f32[4,32,128], index: 1, kind: input, shape index: {}]
  %s2 = inlined_call_operand.vmem [shape: f32[4,4,128], index: 2, kind: output, shape index: {0}]
  %s3 = inlined_call_operand.vmem [shape: f32[4,1], index: 3, kind: output, shape index: {1}]
  %s4 = inlined_call_operand.vmem [shape: f32[4,1], index: 4, kind: output, shape index: {2}]
  %5 = xla_tuple %s2, %s3, %s4
  %s6 = sld [smem:[#allocation0]]
  $region69: #{unet_innermost_forward.4} parent=0
    _
  %s8 = ssub.s32 1, %s6
  %s9 = scalar_select 0, %s8, %s6
  loop: start=0, step=1, limit=6
  $region2: #{unet_innermost_forward.4} parent=0 // loop_pre_header
    _
  $region3: #{unet_innermost_forward.4} parent=0 // loop_header
    %s11 = sphi 0, %s15
    %p12 = scmp.ge.s32.totalorder %s11, 6
    %s18 = sphi 0, %s37
    %s19 = sphi 0, %s33
    %s20 = sphi 0, %s29
    %s21 = sphi 0, %s18
    %s22 = sphi 0, %s19
    %s23 = sphi 0, %s20
    %s24 = sphi 0, %s21
    %s25 = sphi 0, %s22
    %s26 = sphi 0, %s23
    %s42 = sphi 0, %s44
    %s45 = sphi 0, %s42
    %s46 = sphi 0, %s45
    %s62 = sphi 0, %s46
    %s72 = sphi 0, %s74
    %s75 = sphi 0, %s72
    %s76 = sphi 0, %s75
    %s92 = sphi 0, %s76
    %s100 = sphi 0, %s102
    %s103 = sphi 0, %s100
    %s104 = sphi 0, %s103
    %s120 = sphi 0, %s104
    %s124 = sphi 0, %s124
    %s126 = sphi 0, %s124
    %s127 = sphi 0, %s126
    %s141 = sphi 0, %s127
    %s145 = sphi 0, %s145
    %s147 = sphi 0, %s145
    %s148 = sphi 0, %s147
    %s162 = sphi 0, %s148
  $region4: #{unet_innermost_forward.4} parent=0 // loop_header_branch
    %14 = sbr.rel (%p12) target = $region8
  $region5: #{unet_innermost_forward.4} parent=0 // loop_body
    %s16 = ssub.s32 %s11, 1
    %s17 = ssub.s32 %s11, 2
    %s27 = sadd.s32 1, %s20
    %p28 = scmp.ge.s32.totalorder %s27, 1
    %s29 = scalar_select %p28, 0, %s27
    %s30 = sadd.s32 1, %s19
    %s31 = scalar_select %p28, %s30, %s19
    %p32 = scmp.ge.s32.totalorder %s31, 1
    %s33 = scalar_select %p32, 0, %s31
    %s34 = sadd.s32 1, %s18
    %s35 = scalar_select %p32, %s34, %s18
    %p36 = scmp.ge.s32.totalorder %s35, 4
    %s37 = scalar_select %p36, 0, %s35
    %s38 = ssub.s32 %s18, %s37
    %s39 = ssub.s32 %s20, %s29
    %s40 = sor.u32 %s38, %s39
    %p41 = scmp.eq.s32.totalorder %s40, 0
    %s43 = sadd.s32 %s42, 1
    %s44 = scalar_select %p41, %s42, %s43
    %p47 = pneg %p41
    %p48 = scmp.eq.s32.totalorder %s11, 3
    %p49 = por %p47, %p48
    %p50 = scmp.ne.s32.totalorder %s42, %s45
    %p51 = scmp.eq.s32.totalorder %s11, 0
    %p52 = por %p50, %p51
    %p53 = scmp.ne.s32.totalorder %s42, %s45
    %p54 = scmp.eq.s32.totalorder %s16, 3
    %p55 = por %p53, %p54
    %p56 = scmp.ne.s32.totalorder %s45, %s46
    %p57 = scmp.eq.s32.totalorder %s16, 0
    %p58 = por %p56, %p57
    %p59 = scmp.ne.s32.totalorder %s45, %s46
    %p60 = scmp.eq.s32.totalorder %s17, 3
    %p61 = por %p59, %p60
    %p63 = scmp.ne.s32.totalorder %s46, %s62
    %p64 = scmp.eq.s32.totalorder %s17, 0
    %p65 = por %p63, %p64
    %s66 = ssub.s32 %s18, %s37
    %s67 = ssub.s32 %s20, %s29
    %s68 = sor.u32 %s66, %s67
    %s69 = ssub.s32 %s19, %s33
    %s70 = sor.u32 %s68, %s69
    %p71 = scmp.eq.s32.totalorder %s70, 0
    %s73 = sadd.s32 %s72, 1
    %s74 = scalar_select %p71, %s72, %s73
    %p77 = pneg %p71
    %p78 = scmp.eq.s32.totalorder %s11, 3
    %p79 = por %p77, %p78
    %p80 = scmp.ne.s32.totalorder %s72, %s75
    %p81 = scmp.eq.s32.totalorder %s11, 0
    %p82 = por %p80, %p81
    %p83 = scmp.ne.s32.totalorder %s72, %s75
    %p84 = scmp.eq.s32.totalorder %s16, 3
    %p85 = por %p83, %p84
    %p86 = scmp.ne.s32.totalorder %s75, %s76
    %p87 = scmp.eq.s32.totalorder %s16, 0
    %p88 = por %p86, %p87
    %p89 = scmp.ne.s32.totalorder %s75, %s76
    %p90 = scmp.eq.s32.totalorder %s17, 3
    %p91 = por %p89, %p90
    %p93 = scmp.ne.s32.totalorder %s76, %s92
    %p94 = scmp.eq.s32.totalorder %s17, 0
    %p95 = por %p93, %p94
    %s96 = ssub.s32 %s18, %s37
    %s97 = ssub.s32 %s19, %s33
    %s98 = sor.u32 %s96, %s97
    %p99 = scmp.eq.s32.totalorder %s98, 0
    %s101 = sadd.s32 %s100, 1
    %s102 = scalar_select %p99, %s100, %s101
    %p105 = pneg %p99
    %p106 = scmp.eq.s32.totalorder %s11, 3
    %p107 = por %p105, %p106
    %p108 = scmp.ne.s32.totalorder %s100, %s103
    %p109 = scmp.eq.s32.totalorder %s11, 0
    %p110 = por %p108, %p109
    %p111 = scmp.ne.s32.totalorder %s100, %s103
    %p112 = scmp.eq.s32.totalorder %s16, 3
    %p113 = por %p111, %p112
    %p114 = scmp.ne.s32.totalorder %s103, %s104
    %p115 = scmp.eq.s32.totalorder %s16, 0
    %p116 = por %p114, %p115
    %p117 = scmp.ne.s32.totalorder %s103, %s104
    %p118 = scmp.eq.s32.totalorder %s17, 3
    %p119 = por %p117, %p118
    %p121 = scmp.ne.s32.totalorder %s104, %s120
    %p122 = scmp.eq.s32.totalorder %s17, 0
    %p123 = por %p121, %p122
    %s125 = sadd.s32 %s124, 1
    %p128 = scmp.eq.s32.totalorder %s11, 3
    %p129 = scmp.ne.s32.totalorder %s124, %s126
    %p130 = scmp.eq.s32.totalorder %s11, 0
    %p131 = por %p129, %p130
    %p132 = scmp.ne.s32.totalorder %s124, %s126
    %p133 = scmp.eq.s32.totalorder %s16, 3
    %p134 = por %p132, %p133
    %p135 = scmp.ne.s32.totalorder %s126, %s127
    %p136 = scmp.eq.s32.totalorder %s16, 0
    %p137 = por %p135, %p136
    %p138 = scmp.ne.s32.totalorder %s126, %s127
    %p139 = scmp.eq.s32.totalorder %s17, 3
    %p140 = por %p138, %p139
    %p142 = scmp.ne.s32.totalorder %s127, %s141
    %p143 = scmp.eq.s32.totalorder %s17, 0
    %p144 = por %p142, %p143
    %s146 = sadd.s32 %s145, 1
    %p149 = scmp.eq.s32.totalorder %s11, 3
    %p150 = scmp.ne.s32.totalorder %s145, %s147
    %p151 = scmp.eq.s32.totalorder %s11, 0
    %p152 = por %p150, %p151
    %p153 = scmp.ne.s32.totalorder %s145, %s147
    %p154 = scmp.eq.s32.totalorder %s16, 3
    %p155 = por %p153, %p154
    %p156 = scmp.ne.s32.totalorder %s147, %s148
    %p157 = scmp.eq.s32.totalorder %s16, 0
    %p158 = por %p156, %p157
    %p159 = scmp.ne.s32.totalorder %s147, %s148
    %p160 = scmp.eq.s32.totalorder %s17, 3
    %p161 = por %p159, %p160
    %p163 = scmp.ne.s32.totalorder %s148, %s162
    %p164 = scmp.eq.s32.totalorder %s17, 0
    %p165 = por %p163, %p164
    %p166 = scmp.le.s32.totalorder 1, %s11
    %p167 = scmp.lt.s32.totalorder %s11, 5
    %p168 = pnand %p166, %p167
    %p169 = pneg %p168
    // Predicated region
    $region9: #{unet_innermost_forward.4} parent=5 // pred_check
      _
    $region10: #{unet_innermost_forward.4} parent=5 // pred_check_branch
      %171 = sbr.rel (%p168) target = $region12
    $region11: #{unet_innermost_forward.4} parent=5 // pred_region
      %s172 = ssub.s32 %s11, 1
    $region12: #{unet_innermost_forward.4} parent=5 // pred_fallthru
      _
    %p173 = scmp.lt.s32.totalorder %s11, 4
    // Predicated region
    $region13: #{unet_innermost_forward.4} parent=5 // pred_check
      %p174 = pneg %p173
    $region14: #{unet_innermost_forward.4} parent=5 // pred_check_branch
      %176 = sbr.rel (%p174) target = $region16
    $region15: #{unet_innermost_forward.4} parent=5 // pred_region
      // Predicated region
      $region17: #{unet_innermost_forward.4} parent=15 // pred_check
        %p177 = pneg %p52
      $region18: #{unet_innermost_forward.4} parent=15 // pred_check_branch
        %179 = sbr.rel (%p177) target = $region20
      $region19: #{unet_innermost_forward.4} parent=15 // pred_region
        %p180 = scmp.lt.s32.totalorder %s18, 3
        %s181 = scalar_select %p180, %s18, 3
        %p182 = scmp.lt.s32.totalorder %s20, 0
        %s183 = scalar_select %p182, %s20, 0
        %s184 = sadd.s32 %s183, %s181
        %s185 = smul.addr %s184, 4
        %s186 = scalar_lea.vmem %s0, %s185
      $region20: #{unet_innermost_forward.4} parent=15 // pred_fallthru
        _
      // Predicated region
      $region21: #{unet_innermost_forward.4} parent=15 // pred_check
        %p187 = pneg %p82
      $region22: #{unet_innermost_forward.4} parent=15 // pred_check_branch
        %189 = sbr.rel (%p187) target = $region24
      $region23: #{unet_innermost_forward.4} parent=15 // pred_region
        %s190 = smul.u32 4, %s20
        %p191 = scmp.lt.s32.totalorder %s18, 3
        %s192 = scalar_select %p191, %s18, 3
        %p193 = scmp.lt.s32.totalorder %s190, 3
        %s194 = scalar_select %p193, %s190, 3
        %p195 = scmp.lt.s32.totalorder %s19, 0
        %s196 = scalar_select %p195, %s19, 0
        %s197 = sadd.s32 %s196, %s194
        %s198 = smul.addr %s192, 4
        %s199 = sadd.s32 %s197, %s198
        %s200 = smul.addr %s199, 8
        %s201 = scalar_lea.vmem %s1, %s200
        %s202 = smul.u32 4, %s20
      $region24: #{unet_innermost_forward.4} parent=15 // pred_fallthru
        _
    $region16: #{unet_innermost_forward.4} parent=5 // pred_fallthru
      _
    %p203 = scmp.le.s32.totalorder 1, %s11
    %p204 = scmp.lt.s32.totalorder %s11, 5
    %p205 = pnand %p203, %p204
    %p206 = pneg %p205
    // Predicated region
    $region25: #{unet_innermost_forward.4} parent=5 // pred_check
      _
    $region26: #{unet_innermost_forward.4} parent=5 // pred_check_branch
      %208 = sbr.rel (%p205) target = $region28
    $region27: #{unet_innermost_forward.4} parent=5 // pred_region
      %s209 = ssub.s32 %s11, 1
      %p210 = scmp.lt.s32.totalorder %s21, 3
      %s211 = scalar_select %p210, %s21, 3
      %p212 = scmp.lt.s32.totalorder %s23, 0
      %s213 = scalar_select %p212, %s23, 0
      %s214 = sadd.s32 %s213, %s211
      %s215 = smul.addr %s214, 4
      %s216 = scalar_lea.vmem %s0, %s215
      %p217 = pneg %p58
      %p218 = pneg %p55
      %s219 = smul.u32 4, %s23
      %p220 = scmp.lt.s32.totalorder %s21, 3
      %s221 = scalar_select %p220, %s21, 3
      %p222 = scmp.lt.s32.totalorder %s219, 3
      %s223 = scalar_select %p222, %s219, 3
      %p224 = scmp.lt.s32.totalorder %s22, 0
      %s225 = scalar_select %p224, %s22, 0
      %s226 = sadd.s32 %s225, %s223
      %s227 = smul.addr %s221, 4
      %s228 = sadd.s32 %s226, %s227
      %s229 = smul.addr %s228, 8
      %s230 = scalar_lea.vmem %s1, %s229
      %p231 = pneg %p88
      %p232 = pneg %p85
      %p233 = pneg %p116
      %p234 = pneg %p113
      %p235 = scmp.lt.s32.totalorder %s21, 3
      %s236 = scalar_select %p235, %s21, 3
      %p237 = scmp.lt.s32.totalorder %s22, 0
      %s238 = scalar_select %p237, %s22, 0
      %s239 = sadd.s32 %s238, %s236
      %s240 = smul.addr %s239, 4
      %s241 = scalar_lea.vmem %s2, %s240
      %p242 = pneg %p137
      %p243 = pneg %p134
      %p244 = pneg %p158
      %p245 = pneg %p155
      %p246 = scmp.lt.s32.totalorder %s21, 3
      %s247 = scalar_select %p246, %s21, 3
      %p248 = scmp.lt.s32.totalorder %s23, 0
      %s249 = scalar_select %p248, %s23, 0
      %s250 = sadd.s32 %s249, %s247
      %s251 = smul.addr %s250, 4
      %s252 = scalar_lea.vmem %s0, %s251
      %s253 = smul.u32 4, %s23
      %p254 = scmp.lt.s32.totalorder %s21, 3
      %s255 = scalar_select %p254, %s21, 3
      %p256 = scmp.lt.s32.totalorder %s253, 3
      %s257 = scalar_select %p256, %s253, 3
      %p258 = scmp.lt.s32.totalorder %s22, 0
      %s259 = scalar_select %p258, %s22, 0
      %s260 = sadd.s32 %s259, %s257
      %s261 = smul.addr %s255, 4
      %s262 = sadd.s32 %s260, %s261
      %s263 = smul.addr %s262, 8
      %s264 = scalar_lea.vmem %s1, %s263
      %s265 = smul.u32 4, %s23
      %p266 = scmp.lt.s32.totalorder %s21, 3
      %s267 = scalar_select %p266, %s21, 3
      %p268 = scmp.lt.s32.totalorder %s22, 0
      %s269 = scalar_select %p268, %s22, 0
      %s270 = sadd.s32 %s269, %s267
      %s271 = smul.addr %s270, 4
      %s272 = scalar_lea.vmem %s2, %s271
      %p273 = scmp.eq.s32.totalorder %s21, 0
      %p274 = scmp.eq.s32.totalorder %s22, 0
      %p275 = pnand %p273, %p274
      %p276 = pneg %p275
      %p277 = scmp.eq.s32.totalorder %s23, 0
      %p278 = pnand %p276, %p277
      %p279 = pneg %p278
      // Predicated region
      $region29: #{unet_innermost_forward.4} parent=27 // pred_check
        _
      $region30: #{unet_innermost_forward.4} parent=27 // pred_check_branch
        %281 = sbr.rel (%p278) target = $region32
      $region31: #{unet_innermost_forward.4} parent=27 // pred_region
        %vm282 = vcmask 3072
        %283 = vst.msk [vmem:[%s3] sm:$0xf] %vm282, 0.0
        %284 = vst.msk [vmem:[%s4] sm:$0xf] %vm282, 0.0
      $region32: #{unet_innermost_forward.4} parent=27 // pred_fallthru
        _
      // Predicated region
      $region33: #{unet_innermost_forward.4} parent=27 // pred_check
        %p285 = pneg %p277
      $region34: #{unet_innermost_forward.4} parent=27 // pred_check_branch
        %287 = sbr.rel (%p285) target = $region36
      $region35: #{unet_innermost_forward.4} parent=27 // pred_region
        %288 = vst [vmem:[#allocation2] sm:$0xf] 0.0
      $region36: #{unet_innermost_forward.4} parent=27 // pred_fallthru
        _
      %v289 = vld [vmem:[%s264] sm:$0xff]
      %v290 = vld [vmem:[%s264 + $0x8] sm:$0xff]
      %v291 = vld [vmem:[%s264 + $0x10] sm:$0xff]
      %v292 = vld [vmem:[%s264 + $0x18] sm:$0xff]
      %v293 = vmax.f32 %v289, 0.0
      %v294 = vmax.f32 %v290, 0.0
      %v295 = vmax.f32 %v291, 0.0
      %v296 = vmax.f32 %v292, 0.0
      %v297 = vld [vmem:[#allocation2] sm:$0xf]
      %v298 = vld [vmem:[%s252] sm:$0xf]
      %vm299 = vcmask 261120
      %v301 = vsel %vm299, %v298, 0
      %303 = vmatprep.subr.mxu0 0.0
      %304 = vmatpush1.msra.mxu0 0.0
      %305 = vmatprep.subr.mxu0 0.0
      %306 = vmatpush1.msra.mxu0 0.0
      %307 = vmatprep.subr.mxu0 0.0
      %308 = vmatpush1.msra.mxu0 0.0
      %309 = vmatprep.subr.mxu0 0.0
      %310 = vmatpush1.msra.mxu0 0.0
      %311 = vmatprep.subr.mxu0 0.0
      %312 = vmatpush1.msra.mxu0 0.0
      %313 = vmatprep.subr.mxu0 0.0
      %314 = vmatpush1.msra.mxu0 0.0
      %315 = vmatprep.subr.mxu0 0.0
      %316 = vmatpush1.msra.mxu0 0.0
      %317 = vmatprep.subr.mxu0 0.0
      %318 = vmatpush1.msra.mxu0 0.0
      %319 = vmatprep.subr.mxu0 0.0
      %320 = vmatpush1.msra.mxu0 0.0
      %321 = vmatprep.subr.mxu0 0.0
      %322 = vmatpush1.msra.mxu0 0.0
      %323 = vmatprep.subr.mxu0 0.0
      %324 = vmatpush1.msra.mxu0 0.0
      %325 = vmatprep.subr.mxu0 0.0
      %326 = vmatpush1.msra.mxu0 0.0
      %327 = vmatprep.subr.mxu0 0.0
      %328 = vmatpush1.msra.mxu0 %v296
      %329 = vmatprep.subr.mxu0 0.0
      %330 = vmatpush1.msra.mxu0 %v295
      %331 = vmatprep.subr.mxu0 0.0
      %332 = vmatpush1.msra.mxu0 %v294
      %333 = vmatprep.subr.mxu0 0.0
      %334 = vmatpush1.msra.mxu0 %v293
      %335 = vmatprep.subr.mxu0 0.0
      %336 = vmatpush2.msra.mxu0 0.0
      %337 = vmatprep.subr.mxu0 0.0
      %338 = vmatpush2.msra.mxu0 0.0
      %339 = vmatprep.subr.mxu0 0.0
      %340 = vmatpush2.msra.mxu0 0.0
      %341 = vmatprep.subr.mxu0 0.0
      %342 = vmatpush2.msra.mxu0 0.0
      %343 = vmatprep.subr.mxu0 0.0
      %344 = vmatpush2.msra.mxu0 0.0
      %345 = vmatprep.subr.mxu0 0.0
      %346 = vmatpush2.msra.mxu0 0.0
      %347 = vmatprep.subr.mxu0 0.0
      %348 = vmatpush2.msra.mxu0 0.0
      %349 = vmatprep.subr.mxu0 0.0
      %350 = vmatpush2.msra.mxu0 0.0
      %351 = vmatprep.subr.mxu0 0.0
      %352 = vmatpush2.msra.mxu0 0.0
      %353 = vmatprep.subr.mxu0 0.0
      %354 = vmatpush2.msra.mxu0 0.0
      %355 = vmatprep.subr.mxu0 0.0
      %356 = vmatpush2.msra.mxu0 0.0
      %357 = vmatprep.subr.mxu0 0.0
      %358 = vmatpush2.msra.mxu0 0.0
      %359 = vmatprep.subr.mxu0 0.0
      %360 = vmatpush2.msra.mxu0 0.0
      %361 = vmatprep.subr.mxu0 0.0
      %362 = vmatpush2.msra.mxu0 0.0
      %363 = vmatprep.subr.mxu0 0.0
      %364 = vmatpush2.msra.mxu0 0.0
      %365 = vmatprep.subr.mxu0 0.0
      %366 = vmatpush2.msra.mxu0 0.0
      %367 = vmatprep.mubr.f32.mxu0 0.0
      %368 = vmatmul.mubr.f32.gmra.mxu0 %v301
      %v369 = vpop.f32.mrf.mxu0
      %v370 = vadd.f32 0.0, %v369
      %v371 = vpop.f32.mrf.mxu0
      %372 = vdwg.mxu0
      %v373 = vadd.f32 %v297, %v370
      %374 = vst [vmem:[#allocation2] sm:$0xf] %v373
      // Predicated region
      $region37: #{unet_innermost_forward.4} parent=27 // pred_check
        %p375 = pneg %p277
      $region38: #{unet_innermost_forward.4} parent=27 // pred_check_branch
        %377 = sbr.rel (%p375) target = $region40
      $region39: #{unet_innermost_forward.4} parent=27 // pred_region
        %v378 = vld [vmem:[#allocation2] sm:$0xf]
        %379 = vst [vmem:[%s272] sm:$0xf] %v378
        %v380 = vld [vmem:[%s3] sm:$0xf]
        %vm381 = vcmask 1043456
        %v382 = vsel %vm381, %v378, 0.0
        %383 = vadd.xlane.f32.xlu0 %v382
        %v384 = vpop.xlane.xlu0 %383
        %v385 = vadd.f32 %v380, %v384
        %vm386 = vcmask 3072
        %387 = vst.msk [vmem:[%s3] sm:$0xf] %vm386, %v385
        %v388 = vld [vmem:[%s4] sm:$0xf]
        %v389 = vmul.f32 %v378, %v378
        %v390 = vsel %vm381, %v389, 0.0
        %391 = vadd.xlane.f32.xlu0 %v390
        %v392 = vpop.xlane.xlu0 %391
        %v393 = vadd.f32 %v388, %v392
        %394 = vst.msk [vmem:[%s4] sm:$0xf] %vm386, %v393
      $region40: #{unet_innermost_forward.4} parent=27 // pred_fallthru
        _
      %p395 = scmp.lt.s32.totalorder %s21, 3
      %s396 = scalar_select %p395, %s21, 3
      %p397 = scmp.lt.s32.totalorder %s22, 0
      %s398 = scalar_select %p397, %s22, 0
      %s399 = sadd.s32 %s398, %s396
      %s400 = smul.addr %s399, 4
      %s401 = scalar_lea.vmem %s2, %s400
      // Predicated region
      $region41: #{unet_innermost_forward.4} parent=27 // pred_check
        %p402 = pneg %p113
      $region42: #{unet_innermost_forward.4} parent=27 // pred_check_branch
        %404 = sbr.rel (%p402) target = $region44
      $region43: #{unet_innermost_forward.4} parent=27 // pred_region
        _
      $region44: #{unet_innermost_forward.4} parent=27 // pred_fallthru
        _
      // Predicated region
      $region45: #{unet_innermost_forward.4} parent=27 // pred_check
        %p405 = pneg %p134
      $region46: #{unet_innermost_forward.4} parent=27 // pred_check_branch
        %407 = sbr.rel (%p405) target = $region48
      $region47: #{unet_innermost_forward.4} parent=27 // pred_region
        _
      $region48: #{unet_innermost_forward.4} parent=27 // pred_fallthru
        _
      // Predicated region
      $region49: #{unet_innermost_forward.4} parent=27 // pred_check
        %p408 = pneg %p155
      $region50: #{unet_innermost_forward.4} parent=27 // pred_check_branch
        %410 = sbr.rel (%p408) target = $region52
      $region51: #{unet_innermost_forward.4} parent=27 // pred_region
        _
      $region52: #{unet_innermost_forward.4} parent=27 // pred_fallthru
        _
      // Predicated region
      $region53: #{unet_innermost_forward.4} parent=27 // pred_check
        %p411 = pneg %p134
      $region54: #{unet_innermost_forward.4} parent=27 // pred_check_branch
        %413 = sbr.rel (%p411) target = $region56
      $region55: #{unet_innermost_forward.4} parent=27 // pred_region
        _
      $region56: #{unet_innermost_forward.4} parent=27 // pred_fallthru
        _
      // Predicated region
      $region57: #{unet_innermost_forward.4} parent=27 // pred_check
        %p414 = pneg %p155
      $region58: #{unet_innermost_forward.4} parent=27 // pred_check_branch
        %416 = sbr.rel (%p414) target = $region60
      $region59: #{unet_innermost_forward.4} parent=27 // pred_region
        _
      $region60: #{unet_innermost_forward.4} parent=27 // pred_fallthru
        _
    $region28: #{unet_innermost_forward.4} parent=5 // pred_fallthru
      _
    %p417 = scmp.le.s32.totalorder 2, %s11
    // Predicated region
    $region61: #{unet_innermost_forward.4} parent=5 // pred_check
      %p418 = pneg %p417
    $region62: #{unet_innermost_forward.4} parent=5 // pred_check_branch
      %420 = sbr.rel (%p418) target = $region64
    $region63: #{unet_innermost_forward.4} parent=5 // pred_region
      %s421 = ssub.s32 %s11, 2
      // Predicated region
      $region65: #{unet_innermost_forward.4} parent=63 // pred_check
        %p422 = pneg %p119
      $region66: #{unet_innermost_forward.4} parent=63 // pred_check_branch
        %424 = sbr.rel (%p422) target = $region68
      $region67: #{unet_innermost_forward.4} parent=63 // pred_region
        %p425 = scmp.lt.s32.totalorder %s24, 3
        %s426 = scalar_select %p425, %s24, 3
        %p427 = scmp.lt.s32.totalorder %s25, 0
        %s428 = scalar_select %p427, %s25, 0
        %s429 = sadd.s32 %s428, %s426
        %s430 = smul.addr %s429, 4
        %s431 = scalar_lea.vmem %s2, %s430
      $region68: #{unet_innermost_forward.4} parent=63 // pred_fallthru
        _
    $region64: #{unet_innermost_forward.4} parent=5 // pred_fallthru
      _
  $region6: #{unet_innermost_forward.4} parent=0 // loop_footer
    %s15 = sadd.s32 1, %s11
  $region7: #{unet_innermost_forward.4} parent=0 // loop_footer_branch
    %10 = sbr.rel target = $region3
  $region8: #{unet_innermost_forward.4} parent=0 // loop_exit
    _

</llo_original>
